<compile_context>
chip_gen: v6e
topology: v6e:2x2x1
jax: 0.10.0
libtpu: 0.0.40
codegen_flags: <defaults>
</compile_context>

<pallas_src>
from functools import partial

import jax
import jax.numpy as jnp
from jax.experimental import pallas as pl
from jax.experimental.pallas import tpu as pltpu


def _round_up(a: int, m: int) -> int:
    return ((a + m - 1) // m) * m


def _vmem_limits():
    """Return (per-step VMEM budget, vmem_limit_bytes), sized per TPU generation."""
    try:
        cap = int(pltpu.get_tpu_info().vmem_capacity_bytes)   # physical per-core VMEM
    except Exception:
        cap = 64 * 1024 * 1024                                # v7x-conservative fallback
    scoped = min(cap // 2, 64 * 1024 * 1024)                  # v7x: 32 MiB, v6e/v5e: 64 MiB
    budget = (scoped * 3) // 4                                # headroom for Mosaic scratch
    return budget, scoped


def _choose_batch_tile(B, dims, budget_bytes):
    """Largest lane tile (multiple of 128) whose per-step VMEM footprint fits the budget."""
    n = len(dims) - 1
    in_aug = [dims[l] + 1 for l in range(n)]
    out_aug = [dims[l + 1] + 1 if l < n - 1 else dims[l + 1] for l in range(n)]
    widths = [in_aug[0]] + out_aug                             # activation widths per stage
    act_rows = max(_round_up(widths[l], 8) + _round_up(widths[l + 1], 8) for l in range(n))
    wb_bytes = n * _round_up(max(out_aug), 16) * _round_up(max(in_aug), 128) * 2
    per_lane = (_round_up(in_aug[0], 16) * 2 * 2               # bf16 x block, double-buffered
                + 8 * 4 * 2                                    # f32 out block (8-row padded), x2
                + act_rows * 4)                                # live f32 activations
    avail = max(budget_bytes - 2 * wb_bytes, 128 * per_lane)
    cap = min(65536, max(128, (avail // per_lane) // 128 * 128))
    if B <= 1024:
        bt = _round_up(max(B, 1), 128)                         # no forced padding for small B
    else:
        bt = max(256, (B // 4) // 128 * 128)                   # >= 4 steps (>= 2 per v7x TC)
    return max(128, min(bt, cap))


def _pack_params(params, dtype):
    """Pack homogeneous-coordinate weights: hidden layers get W_hat = [[W, b], [0..0, 1]],
    the final layer gets [W, b].  Returns (n_linear, max_out_aug, max_in_aug)."""
    n = len(params)
    in_aug = [w.shape[1] + 1 for w, _ in params]
    out_aug = [(w.shape[0] + 1) if li < n - 1 else w.shape[0]
               for li, (w, _) in enumerate(params)]
    R, C = max(out_aug), max(in_aug)
    wb = jnp.zeros((n, R, C), jnp.float32)
    for li, (w, b) in enumerate(params):
        o, i = w.shape
        wb = wb.at[li, :o, :i].set(w.astype(jnp.float32))
        wb = wb.at[li, :o, i].set(b.reshape(o).astype(jnp.float32))
        if li < n - 1:
            wb = wb.at[li, o, i].set(1.0)          # homogeneous row keeps the ones row alive
    return wb.astype(dtype)


def _make_mlp_kernel(dims):
    """Fused MLP kernel.  Refs: x_ref (input_dim+1, bt) bf16 with a trailing ones row,
    wb_ref (n_linear, R, C) bf16, o_ref (1, bt) f32."""
    n = len(dims) - 1

    def kernel(x_ref, wb_ref, o_ref):
        h = x_ref[...]                                               # bf16, no upcast
        for li in range(n):
            in_aug = dims[li] + 1
            out_aug = dims[li + 1] + 1 if li < n - 1 else dims[li + 1]
            w = wb_ref[li, :out_aug, :in_aug]                        # bf16 -> MXU directly
            h = jnp.dot(w, h, preferred_element_type=jnp.float32)    # f32 accumulate
            if li < n - 1:
                h = jnp.maximum(h, 0.0)                              # ReLU (1-row stays 1)
        o_ref[...] = h.astype(o_ref.dtype)                           # (1, bt) lane-dense store

    return kernel


@partial(jax.jit, static_argnames=("batch_tile", "storage_dtype"))
def pm_model_forward(x, params, batch_tile=None, storage_dtype=jnp.bfloat16):
    """Run the fused MLP Pallas kernel.

    x      : (B, input_dim) float32
    params : list of (W, b) in PyTorch orientation, W: (out_dim, in_dim), b: (out_dim,)
    Returns (B, 1) float32.
    """
    B, input_dim = x.shape
    dims = [input_dim] + [w.shape[0] for w, _ in params]
    assert dims[-1] == 1

    budget, vmem_limit = _vmem_limits()
    if batch_tile is None:
        batch_tile = _choose_batch_tile(B, dims, budget)
    batch_tile = max(128, _round_up(batch_tile, 128))
    B_pad = _round_up(B, batch_tile)
    grid = (B_pad // batch_tile,)

    # Single fused host-side prep (pad + ones row + transpose + cast).  Callers that can
    # cache / produce x directly in this (input_dim+1, B_pad) bf16 layout should do so.
    xp = jnp.pad(x, ((0, B_pad - B), (0, 0)))
    x_t = jnp.concatenate([xp, jnp.ones((B_pad, 1), x.dtype)], axis=1).T.astype(storage_dtype)

    wb = _pack_params(params, storage_dtype)
    kernel = _make_mlp_kernel(dims)

    flops = 2 * B_pad * sum(dims[i] * dims[i + 1] for i in range(len(dims) - 1))
    bytes_accessed = (x_t.size * x_t.dtype.itemsize
                      + wb.size * wb.dtype.itemsize
                      + B_pad * 4)

    out = pl.pallas_call(
        kernel,
        out_shape=jax.ShapeDtypeStruct((1, B_pad), jnp.float32),
        grid=grid,
        in_specs=[
            pl.BlockSpec((input_dim + 1, batch_tile), lambda i: (0, i)),  # x tile, double-buffered
            pl.BlockSpec(wb.shape, lambda i: (0, 0, 0)),                  # packed params, resident
        ],
        out_specs=pl.BlockSpec((1, batch_tile), lambda i: (0, i)),        # lane-dense output row
        compiler_params=pltpu.CompilerParams(
            dimension_semantics=("parallel",),
            vmem_limit_bytes=vmem_limit,
        ),
        cost_estimate=pl.CostEstimate(
            flops=flops, transcendentals=0, bytes_accessed=bytes_accessed),
    )(x_t, wb)

    return out[0, :B].reshape(B, 1)


def init_pm_model_params(key, input_dim, hidden_size):
    """Deterministic init matching PM_Model layer shapes (PyTorch orientation)."""
    dims = [input_dim] + list(hidden_size) + [1]
    params = []
    for li in range(len(dims) - 1):
        in_d, out_d = dims[li], dims[li + 1]
        key, kw, kb = jax.random.split(key, 3)
        bound = 1.0 / float(in_d) ** 0.5  # mimic nn.Linear default init range
        w = jax.random.uniform(kw, (out_d, in_d), jnp.float32, -bound, bound)
        b = jax.random.uniform(kb, (out_d,), jnp.float32, -bound, bound)
        params.append((w, b))
    return params


def pm_model_ref(x, params):
    """Pure-JAX f32 reference (PyTorch orientation) for correctness checking."""
    h = x
    for li, (w, b) in enumerate(params):
        h = h @ w.T + b
        if li < len(params) - 1:
            h = jnp.maximum(h, 0.0)
    return h


if __name__ == "__main__":
    key = jax.random.PRNGKey(0)
    batch = 8
    input_dim = 32
    hidden_size = [64, 32]

    k_params, k_x = jax.random.split(key)
    params = init_pm_model_params(k_params, input_dim, hidden_size)
    x = jax.random.normal(k_x, (batch, input_dim), jnp.float32)

    out = jax.block_until_ready(pm_model_forward(x, params))

    # Validate against the true f32 reference (bf16 storage/MXU compute -> loose tolerance).
    ref = pm_model_ref(x, params)

    assert out.shape == (batch, 1), out.shape
    assert bool(jnp.all(jnp.isfinite(out)))
    assert jnp.allclose(out, ref, atol=3e-2, rtol=3e-2), (out, ref)

    print("KERNEL_OK")
</pallas_src>

<mosaic_0001>
module attributes {stable_mosaic.version = 11 : i64} {
  func.func @kernel(%arg0: i32, %arg1: memref<33x128xbf16, #tpu.memory_space<vmem>>, %arg2: memref<3x65x65xbf16, #tpu.memory_space<vmem>>, %arg3: memref<1x128xf32, #tpu.memory_space<vmem>>) attributes {dimension_semantics = [#tpu.dimension_semantics<parallel>], iteration_bounds = array<i64: 1>, scalar_prefetch = 0 : i64, scratch_operands = 0 : i64, tpu.core_type = #tpu.core_type<tc>, window_params = [{transform_indices = @transform_0, window_bounds = array<i64: 33, 128>}, {pipeline_mode = #tpu.pipeline_mode<synchronous>, transform_indices = @transform_1, window_bounds = array<i64: 3, 65, 65>}, {transform_indices = @transform_2, window_bounds = array<i64: 1, 128>}]} {
    %c0 = arith.constant 0 : index
    %c0_0 = arith.constant 0 : index
    %0 = vector.load %arg1[%c0, %c0_0] : memref<33x128xbf16, #tpu.memory_space<vmem>>, vector<33x128xbf16>
    %c0_1 = arith.constant 0 : index
    %c0_2 = arith.constant 0 : index
    %c0_3 = arith.constant 0 : index
    %1 = vector.load %arg2[%c0_1, %c0_2, %c0_3] : memref<3x65x65xbf16, #tpu.memory_space<vmem>>, vector<1x65x33xbf16>
    %2 = vector.shape_cast %1 : vector<1x65x33xbf16> to vector<65x33xbf16>
    %cst = arith.constant dense<0.000000e+00> : vector<65x128xf32>
    %3 = tpu.matmul %2, %0, %cst {dimension_numbers = #tpu.dot_dimension_numbers<[1], [0], [0], [1], [0, 0, 1, 1], [], []>} : vector<65x33xbf16>, vector<33x128xbf16>, vector<65x128xf32> -> vector<65x128xf32>
    %cst_4 = arith.constant 0.000000e+00 : f32
    %4 = vector.broadcast %cst_4 : f32 to vector<65x128xf32>
    %5 = arith.maximumf %3, %4 : vector<65x128xf32>
    %c1 = arith.constant 1 : index
    %c0_5 = arith.constant 0 : index
    %c0_6 = arith.constant 0 : index
    %6 = vector.load %arg2[%c1, %c0_5, %c0_6] : memref<3x65x65xbf16, #tpu.memory_space<vmem>>, vector<1x33x65xbf16>
    %7 = vector.shape_cast %6 : vector<1x33x65xbf16> to vector<33x65xbf16>
    %cst_7 = arith.constant dense<0.000000e+00> : vector<33x128xf32>
    %8 = tpu.matmul %7, %5, %cst_7 {dimension_numbers = #tpu.dot_dimension_numbers<[1], [0], [0], [1], [0, 0, 1, 1], [], []>} : vector<33x65xbf16>, vector<65x128xf32>, vector<33x128xf32> -> vector<33x128xf32>
    %cst_8 = arith.constant 0.000000e+00 : f32
    %9 = vector.broadcast %cst_8 : f32 to vector<33x128xf32>
    %10 = arith.maximumf %8, %9 : vector<33x128xf32>
    %c2 = arith.constant 2 : index
    %c0_9 = arith.constant 0 : index
    %c0_10 = arith.constant 0 : index
    %11 = vector.load %arg2[%c2, %c0_9, %c0_10] : memref<3x65x65xbf16, #tpu.memory_space<vmem>>, vector<1x1x33xbf16>
    %12 = vector.shape_cast %11 : vector<1x1x33xbf16> to vector<1x33xbf16>
    %cst_11 = arith.constant dense<0.000000e+00> : vector<1x128xf32>
    %13 = tpu.matmul %12, %10, %cst_11 {dimension_numbers = #tpu.dot_dimension_numbers<[1], [0], [0], [1], [0, 0, 1, 1], [], []>} : vector<1x33xbf16>, vector<33x128xf32>, vector<1x128xf32> -> vector<1x128xf32>
    %c0_12 = arith.constant 0 : index
    %c0_13 = arith.constant 0 : index
    %14 = vector.load %arg3[%c0_12, %c0_13] : memref<1x128xf32, #tpu.memory_space<vmem>>, vector<1x128xf32>
    tpu.vector_store %arg3[%c0_12, %c0_13], %13 {strides = array<i32>} : memref<1x128xf32, #tpu.memory_space<vmem>>, vector<1x128xf32>,
    return
  }
  func.func @transform_0(%arg0: i32) -> (i32, i32) {
    %c0_i32 = arith.constant 0 : i32
    %c0_i32_0 = arith.constant 0 : i32
    return %c0_i32, %arg0 : i32, i32
  }
  func.func @transform_1(%arg0: i32) -> (i32, i32, i32) {
    %c0_i32 = arith.constant 0 : i32
    %c0_i32_0 = arith.constant 0 : i32
    %c0_i32_1 = arith.constant 0 : i32
    %c0_i32_2 = arith.constant 0 : i32
    return %c0_i32, %c0_i32_0, %c0_i32_1 : i32, i32, i32
  }
  func.func @transform_2(%arg0: i32) -> (i32, i32) {
    %c0_i32 = arith.constant 0 : i32
    %c0_i32_0 = arith.constant 0 : i32
    return %c0_i32, %arg0 : i32, i32
  }
}

</mosaic_0001>

<llo_original>
// kernel: pm_model_forward.1
$region0: #{pm_model_forward.1}
  #allocation0 [shape = 'u32[]', space=smem, size = 0x4, offset = 0x4, fixed_abs, tag = 'smem constant byte address 0x4 - core index']
  #allocation1 [shape = 'u32[144,128]{1,0:T(1,128)}', space=vmem, size = 0x12000, scoped, tag = 'internal scratch']
  %s0 = inlined_call_operand.vmem [shape: bf16[33,128], index: 0, kind: input, shape index: {}]
  %s1 = inlined_call_operand.vmem [shape: bf16[3,65,65], index: 1, kind: input, shape index: {}]
  %s2 = inlined_call_operand.vmem [shape: f32[1,128], index: 2, kind: output, shape index: {}]
  %s3 = sld [smem:[#allocation0]]
  $region18: #{pm_model_forward.1} parent=0
    _
  %s5 = ssub.s32 1, %s3
  %s6 = scalar_select 0, %s5, %s3
  // Predicated region
  $region2: #{pm_model_forward.1} parent=0 // pred_check
    _
  $region3: #{pm_model_forward.1} parent=0 // pred_check_branch
    %8 = sbr.rel (0) target = $region5
  $region4: #{pm_model_forward.1} parent=0 // pred_region
    _
  $region5: #{pm_model_forward.1} parent=0 // pred_fallthru
    _
  // Predicated region
  $region6: #{pm_model_forward.1} parent=0 // pred_check
    _
  $region7: #{pm_model_forward.1} parent=0 // pred_check_branch
    %10 = sbr.rel (0) target = $region9
  $region8: #{pm_model_forward.1} parent=0 // pred_region
    _
  $region9: #{pm_model_forward.1} parent=0 // pred_fallthru
    _
  %v12 = vld [vmem:[%s0] sm:$0xf]
  %v13 = vld [vmem:[%s0 + $0x4] sm:$0xf]
  %v14 = vld [vmem:[%s0 + $0x8] sm:$0xf]
  %v15 = vld [vmem:[%s0 + $0xc] sm:$0xf]
  %v16 = vld [vmem:[%s0 + $0x10] sm:$0x1]
  %v17 = vld [vmem:[%s1] sm:$0xf]
  %v18 = vld [vmem:[%s1 + $0x4] sm:$0xf]
  %v19 = vld [vmem:[%s1 + $0x8] sm:$0xf]
  %v20 = vld [vmem:[%s1 + $0xc] sm:$0xf]
  %v21 = vld [vmem:[%s1 + $0x10] sm:$0xf]
  %v22 = vld [vmem:[%s1 + $0x14] sm:$0xf]
  %v23 = vld [vmem:[%s1 + $0x18] sm:$0xf]
  %v24 = vld [vmem:[%s1 + $0x1c] sm:$0xf]
  %v25 = vld [vmem:[%s1 + $0x20] sm:$0x1]
  %v35 = vunpack.c.l.b16 %v17
  %v36 = vunpack.c.l.b16 %v18
  %v37 = vunpack.c.l.b16 %v19
  %v38 = vunpack.c.l.b16 %v20
  %v39 = vunpack.c.l.b16 %v21
  %v40 = vunpack.c.l.b16 %v22
  %v41 = vunpack.c.l.b16 %v23
  %v42 = vunpack.c.l.b16 %v24
  %v43 = vunpack.c.l.b16 %v25
  %v44 = vpack.c.b16 %v36, %v35
  %v45 = vpack.c.b16 %v38, %v37
  %v46 = vpack.c.b16 %v40, %v39
  %v47 = vpack.c.b16 %v42, %v41
  %v48 = vpack.c.b16 %v43, %v43
  %v54 = vunpack.c.l.b16 %v12
  %v55 = vunpack.c.l.b16 %v13
  %v56 = vunpack.c.l.b16 %v14
  %v57 = vunpack.c.l.b16 %v15
  %v58 = vunpack.c.l.b16 %v16
  %v59 = vpack.c.b16 %v55, %v54
  %v60 = vpack.c.b16 %v57, %v56
  %v61 = vpack.c.b16 %v58, %v58
  %vm64 = vcmask 269312
  %v66 = vsel %vm64, %v44, 0
  %v69 = vsel %vm64, %v45, 0
  %v72 = vsel %vm64, %v46, 0
  %v75 = vsel %vm64, %v47, 0
  %v78 = vsel %vm64, %v48, 0
  %vm80 = vcmask 1040384
  %v81 = vsel 0, 4294967295, 65535
  %v82 = vsel %vm80, %v81, 0
  %v84 = vand.u32 %v61, %v82
  %86 = vmatprep.subr.bf16.mxu0 0
  %87 = vmatpush1.bf16.msra.mxu0 0
  %88 = vmatprep.subr.bf16.mxu0 0
  %89 = vmatpush1.bf16.msra.mxu0 0
  %90 = vmatprep.subr.bf16.mxu0 0
  %91 = vmatpush1.bf16.msra.mxu0 0
  %92 = vmatprep.subr.bf16.mxu0 0
  %93 = vmatpush1.bf16.msra.mxu0 0
  %94 = vmatprep.subr.bf16.mxu0 0
  %95 = vmatpush1.bf16.msra.mxu0 0
  %96 = vmatprep.subr.bf16.mxu0 0
  %97 = vmatpush1.bf16.msra.mxu0 %v84
  %98 = vmatprep.subr.bf16.mxu0 0
  %99 = vmatpush1.bf16.msra.mxu0 %v60
  %100 = vmatprep.subr.bf16.mxu0 0
  %101 = vmatpush1.bf16.msra.mxu0 %v59
  %102 = vmatprep.subr.bf16.mxu0 0
  %103 = vmatpush2.bf16.msra.mxu0 0
  %104 = vmatprep.subr.bf16.mxu0 0
  %105 = vmatpush2.bf16.msra.mxu0 0
  %106 = vmatprep.subr.bf16.mxu0 0
  %107 = vmatpush2.bf16.msra.mxu0 0
  %108 = vmatprep.subr.bf16.mxu0 0
  %109 = vmatpush2.bf16.msra.mxu0 0
  %110 = vmatprep.subr.bf16.mxu0 0
  %111 = vmatpush2.bf16.msra.mxu0 0
  %112 = vmatprep.subr.bf16.mxu0 0
  %113 = vmatpush2.bf16.msra.mxu0 0
  %114 = vmatprep.subr.bf16.mxu0 0
  %115 = vmatpush2.bf16.msra.mxu0 0
  %116 = vmatprep.subr.bf16.mxu0 0
  %117 = vmatpush2.bf16.msra.mxu0 0
  %118 = vmatprep.mubr.bf16.mxu0 0
  %119 = vmatmul.mubr.bf16.gmra.mxu0 %v66
  %v120 = vpop.f32.mrf.mxu0
  %v121 = vadd.f32 0.0, %v120
  %v122 = vpop.f32.mrf.mxu0
  %v123 = vpop.f32.mrf.mxu0
  %v124 = vadd.f32 0.0, %v123
  %v125 = vpop.f32.mrf.mxu0
  %126 = vmatprep.mubr.bf16.mxu0 0
  %127 = vmatmul.mubr.bf16.gmra.mxu0 %v69
  %v128 = vpop.f32.mrf.mxu0
  %v129 = vadd.f32 0.0, %v128
  %v130 = vpop.f32.mrf.mxu0
  %v131 = vpop.f32.mrf.mxu0
  %v132 = vadd.f32 0.0, %v131
  %v133 = vpop.f32.mrf.mxu0
  %134 = vmatprep.mubr.bf16.mxu0 0
  %135 = vmatmul.mubr.bf16.gmra.mxu0 %v72
  %v136 = vpop.f32.mrf.mxu0
  %v137 = vadd.f32 0.0, %v136
  %v138 = vpop.f32.mrf.mxu0
  %v139 = vpop.f32.mrf.mxu0
  %v140 = vadd.f32 0.0, %v139
  %v141 = vpop.f32.mrf.mxu0
  %142 = vmatprep.mubr.bf16.mxu0 0
  %143 = vmatmul.mubr.bf16.gmra.mxu0 %v75
  %v144 = vpop.f32.mrf.mxu0
  %v145 = vadd.f32 0.0, %v144
  %v146 = vpop.f32.mrf.mxu0
  %v147 = vpop.f32.mrf.mxu0
  %v148 = vadd.f32 0.0, %v147
  %v149 = vpop.f32.mrf.mxu0
  %150 = vmatprep.mubr.bf16.mxu0 0
  %151 = vmatmul.mubr.bf16.gmra.mxu0 %v78
  %v152 = vpop.f32.mrf.mxu0
  %v153 = vadd.f32 0.0, %v152
  %v154 = vpop.f32.mrf.mxu0
  %v155 = vpop.f32.mrf.mxu0
  %v156 = vpop.f32.mrf.mxu0
  %157 = vdwg.mxu0
  %v158 = vmax.f32 %v121, 0.0
  %v159 = vmax.f32 %v124, 0.0
  %v160 = vmax.f32 %v129, 0.0
  %v161 = vmax.f32 %v132, 0.0
  %v162 = vmax.f32 %v137, 0.0
  %v163 = vmax.f32 %v140, 0.0
  %v164 = vmax.f32 %v145, 0.0
  %v165 = vmax.f32 %v148, 0.0
  %v166 = vmax.f32 %v153, 0.0
  %s167 = scalar_lea.vmem %s1, 36
  %v168 = vld [vmem:[%s167] sm:$0xf]
  %v169 = vld [vmem:[%s167 + $0x4] sm:$0xf]
  %v170 = vld [vmem:[%s167 + $0x8] sm:$0xf]
  %v171 = vld [vmem:[%s167 + $0xc] sm:$0xf]
  %v172 = vld [vmem:[%s167 + $0x10] sm:$0x1]
  %v178 = vunpack.c.l.b16 %v168
  %v179 = vunpack.c.l.b16 %v169
  %v180 = vunpack.c.l.b16 %v170
  %v181 = vunpack.c.l.b16 %v171
  %v182 = vunpack.c.l.b16 %v172
  %v183 = vpack.c.b16 %v179, %v178
  %v184 = vpack.c.b16 %v181, %v180
  %v185 = vpack.c.b16 %v182, %v182
  %vm186 = vcmask 531456
  %v188 = vsel %vm186, %v183, 0
  %v191 = vsel %vm186, %v184, 0
  %v194 = vsel %vm186, %v185, 0
  %v197 = vsel %vm80, %v166, 0
  %199 = vmatprep.subr.mxu0 0.0
  %200 = vmatpush1.msra.mxu0 0.0
  %201 = vmatprep.subr.mxu0 0.0
  %202 = vmatpush1.msra.mxu0 0.0
  %203 = vmatprep.subr.mxu0 0.0
  %204 = vmatpush1.msra.mxu0 0.0
  %205 = vmatprep.subr.mxu0 0.0
  %206 = vmatpush1.msra.mxu0 0.0
  %207 = vmatprep.subr.mxu0 0.0
  %208 = vmatpush1.msra.mxu0 0.0
  %209 = vmatprep.subr.mxu0 0.0
  %210 = vmatpush1.msra.mxu0 0.0
  %211 = vmatprep.subr.mxu0 0.0
  %212 = vmatpush1.msra.mxu0 0.0
  %213 = vmatprep.subr.mxu0 0.0
  %214 = vmatpush1.msra.mxu0 %v197
  %215 = vmatprep.subr.mxu0 0.0
  %216 = vmatpush1.msra.mxu0 %v165
  %217 = vmatprep.subr.mxu0 0.0
  %218 = vmatpush1.msra.mxu0 %v164
  %219 = vmatprep.subr.mxu0 0.0
  %220 = vmatpush1.msra.mxu0 %v163
  %221 = vmatprep.subr.mxu0 0.0
  %222 = vmatpush1.msra.mxu0 %v162
  %223 = vmatprep.subr.mxu0 0.0
  %224 = vmatpush1.msra.mxu0 %v161
  %225 = vmatprep.subr.mxu0 0.0
  %226 = vmatpush1.msra.mxu0 %v160
  %227 = vmatprep.subr.mxu0 0.0
  %228 = vmatpush1.msra.mxu0 %v159
  %229 = vmatprep.subr.mxu0 0.0
  %230 = vmatpush1.msra.mxu0 %v158
  %231 = vmatprep.subr.mxu0 0.0
  %232 = vmatpush2.msra.mxu0 0.0
  %233 = vmatprep.subr.mxu0 0.0
  %234 = vmatpush2.msra.mxu0 0.0
  %235 = vmatprep.subr.mxu0 0.0
  %236 = vmatpush2.msra.mxu0 0.0
  %237 = vmatprep.subr.mxu0 0.0
  %238 = vmatpush2.msra.mxu0 0.0
  %239 = vmatprep.subr.mxu0 0.0
  %240 = vmatpush2.msra.mxu0 0.0
  %241 = vmatprep.subr.mxu0 0.0
  %242 = vmatpush2.msra.mxu0 0.0
  %243 = vmatprep.subr.mxu0 0.0
  %244 = vmatpush2.msra.mxu0 0.0
  %245 = vmatprep.subr.mxu0 0.0
  %246 = vmatpush2.msra.mxu0 0.0
  %247 = vmatprep.subr.mxu0 0.0
  %248 = vmatpush2.msra.mxu0 0.0
  %249 = vmatprep.subr.mxu0 0.0
  %250 = vmatpush2.msra.mxu0 0.0
  %251 = vmatprep.subr.mxu0 0.0
  %252 = vmatpush2.msra.mxu0 0.0
  %253 = vmatprep.subr.mxu0 0.0
  %254 = vmatpush2.msra.mxu0 0.0
  %255 = vmatprep.subr.mxu0 0.0
  %256 = vmatpush2.msra.mxu0 0.0
  %257 = vmatprep.subr.mxu0 0.0
  %258 = vmatpush2.msra.mxu0 0.0
  %259 = vmatprep.subr.mxu0 0.0
  %260 = vmatpush2.msra.mxu0 0.0
  %261 = vmatprep.subr.mxu0 0.0
  %262 = vmatpush2.msra.mxu0 0.0
  %263 = vmatprep.mubr.bf16.mxu0 0
  %264 = vmatmul.mubr.bf16.gmra.mxu0 %v188
  %v265 = vpop.f32.mrf.mxu0
  %v266 = vadd.f32 0.0, %v265
  %v267 = vpop.f32.mrf.mxu0
  %v268 = vpop.f32.mrf.mxu0
  %v269 = vadd.f32 0.0, %v268
  %v270 = vpop.f32.mrf.mxu0
  %271 = vmatprep.mubr.bf16.mxu0 0
  %272 = vmatmul.mubr.bf16.gmra.mxu0 %v191
  %v273 = vpop.f32.mrf.mxu0
  %v274 = vadd.f32 0.0, %v273
  %v275 = vpop.f32.mrf.mxu0
  %v276 = vpop.f32.mrf.mxu0
  %v277 = vadd.f32 0.0, %v276
  %v278 = vpop.f32.mrf.mxu0
  %279 = vmatprep.mubr.bf16.mxu0 0
  %280 = vmatmul.mubr.bf16.gmra.mxu0 %v194
  %v281 = vpop.f32.mrf.mxu0
  %v282 = vadd.f32 0.0, %v281
  %v283 = vpop.f32.mrf.mxu0
  %v284 = vpop.f32.mrf.mxu0
  %v285 = vpop.f32.mrf.mxu0
  %286 = vdwg.mxu0
  %v287 = vmax.f32 %v266, 0.0
  %v288 = vmax.f32 %v269, 0.0
  %v289 = vmax.f32 %v274, 0.0
  %v290 = vmax.f32 %v277, 0.0
  %v291 = vmax.f32 %v282, 0.0
  %s292 = scalar_lea.vmem %s1, 72
  %v293 = vld [vmem:[%s292] sm:$0x1]
  %v295 = vsel %vm64, %v293, 0
  %v298 = vsel %vm80, %v291, 0
  %300 = vmatprep.subr.mxu0 0.0
  %301 = vmatpush1.msra.mxu0 0.0
  %302 = vmatprep.subr.mxu0 0.0
  %303 = vmatpush1.msra.mxu0 0.0
  %304 = vmatprep.subr.mxu0 0.0
  %305 = vmatpush1.msra.mxu0 0.0
  %306 = vmatprep.subr.mxu0 0.0
  %307 = vmatpush1.msra.mxu0 0.0
  %308 = vmatprep.subr.mxu0 0.0
  %309 = vmatpush1.msra.mxu0 0.0
  %310 = vmatprep.subr.mxu0 0.0
  %311 = vmatpush1.msra.mxu0 0.0
  %312 = vmatprep.subr.mxu0 0.0
  %313 = vmatpush1.msra.mxu0 0.0
  %314 = vmatprep.subr.mxu0 0.0
  %315 = vmatpush1.msra.mxu0 0.0
  %316 = vmatprep.subr.mxu0 0.0
  %317 = vmatpush1.msra.mxu0 0.0
  %318 = vmatprep.subr.mxu0 0.0
  %319 = vmatpush1.msra.mxu0 0.0
  %320 = vmatprep.subr.mxu0 0.0
  %321 = vmatpush1.msra.mxu0 0.0
  %322 = vmatprep.subr.mxu0 0.0
  %323 = vmatpush1.msra.mxu0 %v298
  %324 = vmatprep.subr.mxu0 0.0
  %325 = vmatpush1.msra.mxu0 %v290
  %326 = vmatprep.subr.mxu0 0.0
  %327 = vmatpush1.msra.mxu0 %v289
  %328 = vmatprep.subr.mxu0 0.0
  %329 = vmatpush1.msra.mxu0 %v288
  %330 = vmatprep.subr.mxu0 0.0
  %331 = vmatpush1.msra.mxu0 %v287
  %332 = vmatprep.subr.mxu0 0.0
  %333 = vmatpush2.msra.mxu0 0.0
  %334 = vmatprep.subr.mxu0 0.0
  %335 = vmatpush2.msra.mxu0 0.0
  %336 = vmatprep.subr.mxu0 0.0
  %337 = vmatpush2.msra.mxu0 0.0
  %338 = vmatprep.subr.mxu0 0.0
  %339 = vmatpush2.msra.mxu0 0.0
  %340 = vmatprep.subr.mxu0 0.0
  %341 = vmatpush2.msra.mxu0 0.0
  %342 = vmatprep.subr.mxu0 0.0
  %343 = vmatpush2.msra.mxu0 0.0
  %344 = vmatprep.subr.mxu0 0.0
  %345 = vmatpush2.msra.mxu0 0.0
  %346 = vmatprep.subr.mxu0 0.0
  %347 = vmatpush2.msra.mxu0 0.0
  %348 = vmatprep.subr.mxu0 0.0
  %349 = vmatpush2.msra.mxu0 0.0
  %350 = vmatprep.subr.mxu0 0.0
  %351 = vmatpush2.msra.mxu0 0.0
  %352 = vmatprep.subr.mxu0 0.0
  %353 = vmatpush2.msra.mxu0 0.0
  %354 = vmatprep.subr.mxu0 0.0
  %355 = vmatpush2.msra.mxu0 0.0
  %356 = vmatprep.subr.mxu0 0.0
  %357 = vmatpush2.msra.mxu0 0.0
  %358 = vmatprep.subr.mxu0 0.0
  %359 = vmatpush2.msra.mxu0 0.0
  %360 = vmatprep.subr.mxu0 0.0
  %361 = vmatpush2.msra.mxu0 0.0
  %362 = vmatprep.subr.mxu0 0.0
  %363 = vmatpush2.msra.mxu0 0.0
  %364 = vmatprep.mubr.bf16.mxu0 0
  %365 = vmatmul.mubr.bf16.gmra.mxu0 %v295
  %v366 = vpop.f32.mrf.mxu0
  %v367 = vadd.f32 0.0, %v366
  %v368 = vpop.f32.mrf.mxu0
  %v369 = vpop.f32.mrf.mxu0
  %v370 = vpop.f32.mrf.mxu0
  %371 = vdwg.mxu0
  %372 = vst [vmem:[%s2] sm:$0x1] %v367
  // Predicated region
  $region10: #{pm_model_forward.1} parent=0 // pred_check
    _
  $region11: #{pm_model_forward.1} parent=0 // pred_check_branch
    %374 = sbr.rel (0) target = $region13
  $region12: #{pm_model_forward.1} parent=0 // pred_region
    _
  $region13: #{pm_model_forward.1} parent=0 // pred_fallthru
    _
  // Predicated region
  $region14: #{pm_model_forward.1} parent=0 // pred_check
    _
  $region15: #{pm_model_forward.1} parent=0 // pred_check_branch
    %376 = sbr.rel (0) target = $region17
  $region16: #{pm_model_forward.1} parent=0 // pred_region
    _
  $region17: #{pm_model_forward.1} parent=0 // pred_fallthru
    _

</llo_original>
